<compile_context>
chip_gen: v7x
topology: tpu7x:2x2x1
jax: 0.10.0
libtpu: 0.0.40
codegen_flags: <defaults>
</compile_context>

<pallas_src>
import functools

import jax
import jax.numpy as jnp
from jax.experimental import pallas as pl
from jax.experimental.pallas import tpu as pltpu

_LANE = 128
_SUBLANE = 8


def _round_up(x, m):
    return ((x + m - 1) // m) * m


def _logreg_kernel(x_ref, w_ref, b_ref, o_ref):
    # x_ref: [TB, Dp]  feature tile (D zero-padded to 128)
    # w_ref: [Cp, Dp]  PyTorch-layout weight, zero-padded, resident across grid steps
    # b_ref: [1,  Cp]  bias, zero-padded, resident across grid steps
    # o_ref: [TB, Cp]  lane-dense output tile
    acc = jax.lax.dot_general(
        x_ref[...],
        w_ref[...],
        dimension_numbers=(((1,), (1,)), ((), ())),  # x@W.T without wrapper transpose
        preferred_element_type=jnp.float32,
    )
    o_ref[...] = (acc + b_ref[...]).astype(o_ref.dtype)


@functools.partial(jax.jit, static_argnames=("block_b",))
def logistic_regression_forward(feature, weight, bias, *, block_b=512):
    """feature: [B, D] f32, weight: [C, D] f32 (PyTorch nn.Linear layout), bias: [C] f32."""
    B, D = feature.shape
    C = weight.shape[0]

    # Pad class & contraction axes to full 128-lane tiles; pad batch to the tile size.
    Dp = _round_up(D, _LANE)
    Cp = _round_up(C, _LANE)
    Bp = _round_up(B, _SUBLANE)
    tb = min(block_b, Bp)          # 512-row tiles fit comfortably in VMEM on v5e/v6e/v7x
    Bp = _round_up(Bp, tb)

    x_p = jnp.pad(feature, ((0, Bp - B), (0, Dp - D)))
    w_p = jnp.pad(weight, ((0, Cp - C), (0, Dp - D)))
    b_p = jnp.pad(bias, (0, Cp - C)).reshape(1, Cp)

    out = pl.pallas_call(
        _logreg_kernel,
        out_shape=jax.ShapeDtypeStruct((Bp, Cp), feature.dtype),
        grid=(Bp // tb,),
        in_specs=[
            pl.BlockSpec((tb, Dp), lambda i: (i, 0)),   # stream batch tiles
            pl.BlockSpec((Cp, Dp), lambda i: (0, 0)),   # weight loaded once, kept resident
            pl.BlockSpec((1, Cp), lambda i: (0, 0)),    # bias kept resident
        ],
        out_specs=pl.BlockSpec((tb, Cp), lambda i: (i, 0)),
        compiler_params=pltpu.CompilerParams(
            dimension_semantics=("parallel",),          # shards batch grid over v7x's 2 TCs
        ),
        cost_estimate=pl.CostEstimate(
            flops=2 * B * D * C,
            transcendentals=0,
            bytes_accessed=4 * (B * D + C * D + C + B * C),
        ),
    )(x_p, w_p, b_p)

    return out[:B, :C]


if __name__ == "__main__":
    # Small, forward-implied shapes: batch=8, input_size=32, num_classes=16.
    batch, input_size, num_classes = 8, 32, 16

    key = jax.random.PRNGKey(0)
    k_x, k_w, k_b = jax.random.split(key, 3)

    # Deterministic init, matching nn.Linear's U(-1/sqrt(in), 1/sqrt(in)).
    bound = 1.0 / jnp.sqrt(jnp.float32(input_size))
    weight = jax.random.uniform(k_w, (num_classes, input_size),
                                minval=-bound, maxval=bound, dtype=jnp.float32)
    bias = jax.random.uniform(k_b, (num_classes,),
                              minval=-bound, maxval=bound, dtype=jnp.float32)
    feature = jax.random.normal(k_x, (batch, input_size), dtype=jnp.float32)

    out = logistic_regression_forward(feature, weight, bias)
    out = jax.block_until_ready(out)

    # Reference check against plain JAX (same semantics as nn.Linear forward).
    ref = feature @ weight.T + bias
    assert out.shape == (batch, num_classes)
    assert jnp.allclose(out, ref, atol=1e-5, rtol=1e-5)

    print("KERNEL_OK")
</pallas_src>

<mosaic_0001>
module attributes {stable_mosaic.version = 11 : i64} {
  func.func @_logreg_kernel(%arg0: i32, %arg1: memref<8x128xf32, #tpu.memory_space<vmem>>, %arg2: memref<128x128xf32, #tpu.memory_space<vmem>>, %arg3: memref<1x128xf32, #tpu.memory_space<vmem>>, %arg4: memref<8x128xf32, #tpu.memory_space<vmem>>) attributes {dimension_semantics = [#tpu.dimension_semantics<parallel>], iteration_bounds = array<i64: 1>, scalar_prefetch = 0 : i64, scratch_operands = 0 : i64, tpu.core_type = #tpu.core_type<tc>, window_params = [{transform_indices = @transform_0, window_bounds = array<i64: 8, 128>}, {pipeline_mode = #tpu.pipeline_mode<synchronous>, transform_indices = @transform_1, window_bounds = array<i64: 128, 128>}, {pipeline_mode = #tpu.pipeline_mode<synchronous>, transform_indices = @transform_2, window_bounds = array<i64: 1, 128>}, {transform_indices = @transform_3, window_bounds = array<i64: 8, 128>}]} {
    %c0 = arith.constant 0 : index
    %c0_0 = arith.constant 0 : index
    %0 = vector.load %arg1[%c0, %c0_0] : memref<8x128xf32, #tpu.memory_space<vmem>>, vector<8x128xf32>
    %c0_1 = arith.constant 0 : index
    %c0_2 = arith.constant 0 : index
    %1 = vector.load %arg2[%c0_1, %c0_2] : memref<128x128xf32, #tpu.memory_space<vmem>>, vector<128x128xf32>
    %cst = arith.constant dense<0.000000e+00> : vector<8x128xf32>
    %2 = tpu.matmul %0, %1, %cst {dimension_numbers = #tpu.dot_dimension_numbers<[1], [1], [0], [0], [0, 0, 1, 0], [], []>} : vector<8x128xf32>, vector<128x128xf32>, vector<8x128xf32> -> vector<8x128xf32>
    %c0_3 = arith.constant 0 : index
    %c0_4 = arith.constant 0 : index
    %3 = vector.load %arg3[%c0_3, %c0_4] : memref<1x128xf32, #tpu.memory_space<vmem>>, vector<1x128xf32>
    %4 = vector.broadcast %3 : vector<1x128xf32> to vector<8x128xf32>
    %5 = arith.addf %2, %4 : vector<8x128xf32>
    %c0_5 = arith.constant 0 : index
    %c0_6 = arith.constant 0 : index
    %6 = vector.load %arg4[%c0_5, %c0_6] : memref<8x128xf32, #tpu.memory_space<vmem>>, vector<8x128xf32>
    tpu.vector_store %arg4[%c0_5, %c0_6], %5 {strides = array<i32>} : memref<8x128xf32, #tpu.memory_space<vmem>>, vector<8x128xf32>,
    return
  }
  func.func @transform_0(%arg0: i32) -> (i32, i32) {
    %c0_i32 = arith.constant 0 : i32
    %c0_i32_0 = arith.constant 0 : i32
    return %arg0, %c0_i32 : i32, i32
  }
  func.func @transform_1(%arg0: i32) -> (i32, i32) {
    %c0_i32 = arith.constant 0 : i32
    %c0_i32_0 = arith.constant 0 : i32
    %c0_i32_1 = arith.constant 0 : i32
    return %c0_i32, %c0_i32_0 : i32, i32
  }
  func.func @transform_2(%arg0: i32) -> (i32, i32) {
    %c0_i32 = arith.constant 0 : i32
    %c0_i32_0 = arith.constant 0 : i32
    %c0_i32_1 = arith.constant 0 : i32
    return %c0_i32, %c0_i32_0 : i32, i32
  }
  func.func @transform_3(%arg0: i32) -> (i32, i32) {
    %c0_i32 = arith.constant 0 : i32
    %c0_i32_0 = arith.constant 0 : i32
    return %arg0, %c0_i32 : i32, i32
  }
}

</mosaic_0001>

<llo_original>
// kernel: logistic_regression_forward.1
$region0: #{logistic_regression_forward.1}
  #allocation0 [shape = 'u32[]', space=smem, size = 0x4, offset = 0x4, fixed_abs, tag = 'smem constant byte address 0x4 - core index']
  #allocation1 [shape = 'u32[144,128]{1,0:T(1,128)}', space=vmem, size = 0x12000, scoped, tag = 'internal scratch']
  %s0 = inlined_call_operand.vmem [shape: f32[8,128], index: 0, kind: input, shape index: {}]
  %s1 = inlined_call_operand.vmem [shape: f32[128,128], index: 1, kind: input, shape index: {}]
  %s2 = inlined_call_operand.vmem [shape: f32[1,128], index: 2, kind: input, shape index: {}]
  %s3 = inlined_call_operand.hbm [shape: f32[8,128], index: 3, kind: output, shape index: {}]
  %s4 = sld [smem:[#allocation0]]
  $region22: #{logistic_regression_forward.1} parent=0
    _
  %s6 = ssub.s32 1, %s4
  %s7 = scalar_select 0, %s6, %s4
  $region1: #{logistic_regression_forward.1} parent=0
    #allocation2 [shape = 'u8[4096]{0}', space=vmem, size = 0x1000, scoped, tag = 'output window, operand 0, single buffered']
    #allocation3 [shape = 's32[1]{0}', space=sflag, size = 0x4, scoped, tag = 'scoped memory for logistic_regression_forward.1']
    %8 = vsyncpa [#allocation3], 0
    // Predicated region
    $region2: #{logistic_regression_forward.1} parent=1 // pred_check
      _
    $region3: #{logistic_regression_forward.1} parent=1 // pred_check_branch
      %10 = sbr.rel (0) target = $region5
    $region4: #{logistic_regression_forward.1} parent=1 // pred_region
      _
    $region5: #{logistic_regression_forward.1} parent=1 // pred_fallthru
      _
    // Predicated region
    $region6: #{logistic_regression_forward.1} parent=1 // pred_check
      _
    $region7: #{logistic_regression_forward.1} parent=1 // pred_check_branch
      %12 = sbr.rel (0) target = $region9
    $region8: #{logistic_regression_forward.1} parent=1 // pred_region
      _
    $region9: #{logistic_regression_forward.1} parent=1 // pred_fallthru
      _
    // Predicated region
    $region10: #{logistic_regression_forward.1} parent=1 // pred_check
      _
    $region11: #{logistic_regression_forward.1} parent=1 // pred_check_branch
      %14 = sbr.rel (0) target = $region13
    $region12: #{logistic_regression_forward.1} parent=1 // pred_region
      _
    $region13: #{logistic_regression_forward.1} parent=1 // pred_fallthru
      _
    %v15 = vld [vmem:[%s0] sm:$0xff]
    %v16 = vld [vmem:[%s1] sm:$0xff]
    %v17 = vld [vmem:[%s1 + $0x8] sm:$0xff]
    %v18 = vld [vmem:[%s1 + $0x10] sm:$0xff]
    %v19 = vld [vmem:[%s1 + $0x18] sm:$0xff]
    %v20 = vld [vmem:[%s1 + $0x20] sm:$0xff]
    %v21 = vld [vmem:[%s1 + $0x28] sm:$0xff]
    %v22 = vld [vmem:[%s1 + $0x30] sm:$0xff]
    %v23 = vld [vmem:[%s1 + $0x38] sm:$0xff]
    %v24 = vld [vmem:[%s1 + $0x40] sm:$0xff]
    %v25 = vld [vmem:[%s1 + $0x48] sm:$0xff]
    %v26 = vld [vmem:[%s1 + $0x50] sm:$0xff]
    %v27 = vld [vmem:[%s1 + $0x58] sm:$0xff]
    %v28 = vld [vmem:[%s1 + $0x60] sm:$0xff]
    %v29 = vld [vmem:[%s1 + $0x68] sm:$0xff]
    %v30 = vld [vmem:[%s1 + $0x70] sm:$0xff]
    %v31 = vld [vmem:[%s1 + $0x78] sm:$0xff]
    %v32 = vld [vmem:[%s2] sm:$0x1]
    %v34 = vlaneseq
    %v35 = vshrl.u32 %v34, 7
    %v36 = vsub.s32 0, %v35
    %v37 = vrot.slane %v32, %v36
    %39 = vmatprep.subr.mxu0 0.0
    %40 = vmatpush1.xpose.msra.mxu0 %v16
    %41 = vmatprep.subr.mxu0 0.0
    %42 = vmatpush1.xpose.msra.mxu0 %v17
    %43 = vmatprep.subr.mxu0 0.0
    %44 = vmatpush1.xpose.msra.mxu0 %v18
    %45 = vmatprep.subr.mxu0 0.0
    %46 = vmatpush1.xpose.msra.mxu0 %v19
    %47 = vmatprep.subr.mxu0 0.0
    %48 = vmatpush1.xpose.msra.mxu0 %v20
    %49 = vmatprep.subr.mxu0 0.0
    %50 = vmatpush1.xpose.msra.mxu0 %v21
    %51 = vmatprep.subr.mxu0 0.0
    %52 = vmatpush1.xpose.msra.mxu0 %v22
    %53 = vmatprep.subr.mxu0 0.0
    %54 = vmatpush1.xpose.msra.mxu0 %v23
    %55 = vmatprep.subr.mxu0 0.0
    %56 = vmatpush1.xpose.msra.mxu0 %v24
    %57 = vmatprep.subr.mxu0 0.0
    %58 = vmatpush1.xpose.msra.mxu0 %v25
    %59 = vmatprep.subr.mxu0 0.0
    %60 = vmatpush1.xpose.msra.mxu0 %v26
    %61 = vmatprep.subr.mxu0 0.0
    %62 = vmatpush1.xpose.msra.mxu0 %v27
    %63 = vmatprep.subr.mxu0 0.0
    %64 = vmatpush1.xpose.msra.mxu0 %v28
    %65 = vmatprep.subr.mxu0 0.0
    %66 = vmatpush1.xpose.msra.mxu0 %v29
    %67 = vmatprep.subr.mxu0 0.0
    %68 = vmatpush1.xpose.msra.mxu0 %v30
    %69 = vmatprep.subr.mxu0 0.0
    %70 = vmatpush1.xpose.msra.mxu0 %v31
    %71 = vmatprep.subr.mxu0 0.0
    %72 = vmatpush1.xpose.msra.mxu0 0.0
    %73 = vmatprep.subr.mxu0 0.0
    %74 = vmatpush1.xpose.msra.mxu0 0.0
    %75 = vmatprep.subr.mxu0 0.0
    %76 = vmatpush1.xpose.msra.mxu0 0.0
    %77 = vmatprep.subr.mxu0 0.0
    %78 = vmatpush1.xpose.msra.mxu0 0.0
    %79 = vmatprep.subr.mxu0 0.0
    %80 = vmatpush1.xpose.msra.mxu0 0.0
    %81 = vmatprep.subr.mxu0 0.0
    %82 = vmatpush1.xpose.msra.mxu0 0.0
    %83 = vmatprep.subr.mxu0 0.0
    %84 = vmatpush1.xpose.msra.mxu0 0.0
    %85 = vmatprep.subr.mxu0 0.0
    %86 = vmatpush1.xpose.msra.mxu0 0.0
    %87 = vmatprep.subr.mxu0 0.0
    %88 = vmatpush1.xpose.msra.mxu0 0.0
    %89 = vmatprep.subr.mxu0 0.0
    %90 = vmatpush1.xpose.msra.mxu0 0.0
    %91 = vmatprep.subr.mxu0 0.0
    %92 = vmatpush1.xpose.msra.mxu0 0.0
    %93 = vmatprep.subr.mxu0 0.0
    %94 = vmatpush1.xpose.msra.mxu0 0.0
    %95 = vmatprep.subr.mxu0 0.0
    %96 = vmatpush1.xpose.msra.mxu0 0.0
    %97 = vmatprep.subr.mxu0 0.0
    %98 = vmatpush1.xpose.msra.mxu0 0.0
    %99 = vmatprep.subr.mxu0 0.0
    %100 = vmatpush1.xpose.msra.mxu0 0.0
    %101 = vmatprep.subr.mxu0 0.0
    %102 = vmatpush1.xpose.msra.mxu0 0.0
    %103 = vmatprep.mubr.f32.mxu0 0.0
    %104 = vmatmul.mubr.f32.gmra.mrb[0].mxu0 %v15
    %v105 = vpop.f32.mrb[0].mxu0
    %v106 = vadd.f32 %v37, %v105
    %v107 = vpop.f32.mrb[0].mxu0
    %108 = vdwg.mxu0
    %109 = vst [vmem:[#allocation2] sm:$0xff] %v106
    // Predicated region
    $region14: #{logistic_regression_forward.1} parent=1 // pred_check
      _
    $region15: #{logistic_regression_forward.1} parent=1 // pred_check_branch
      %111 = sbr.rel (0) target = $region17
    $region16: #{logistic_regression_forward.1} parent=1 // pred_region
      %s113 = ssub.s32 128, 128
      %114 = vsyncadd [#allocation3], %s113
      %s116 = sshll.u32 [#allocation2], 4
      %s117 = int_to_ptr.vmem [resolvable:$true] %s116
      %119 = dma.vmem_to_hbm [thread:$0]  %s117, 128, %s3, [#allocation3]
    $region17: #{logistic_regression_forward.1} parent=1 // pred_fallthru
      _
    // Predicated region
    $region18: #{logistic_regression_forward.1} parent=1 // pred_check
      _
    $region19: #{logistic_regression_forward.1} parent=1 // pred_check_branch
      %121 = sbr.rel (0) target = $region21
    $region20: #{logistic_regression_forward.1} parent=1 // pred_region
      %122 = dma.done [#allocation3], 128
    $region21: #{logistic_regression_forward.1} parent=1 // pred_fallthru
      _
    %123 = vsyncpa [#allocation3], 1

</llo_original>
